<compile_context>
chip_gen: v5e
topology: v5e:2x2
jax: 0.10.0
libtpu: 0.0.40
codegen_flags: <defaults>
</compile_context>

<pallas_src>
import functools

import jax
import jax.numpy as jnp
from jax.experimental import pallas as pl
from jax.experimental.pallas import tpu as pltpu


def _round_up(x, m):
    return (x + m - 1) // m * m


def _conv_relu_kernel(xa_ref, xb1_ref, xb2_ref, w_ref, b_ref, o_ref, *, use_im2col):
    """One (batch, row-tile) slab per grid step.

    xa_ref : (1, TH, W+2, Cin)   main rows of the zero-padded NHWC input
    xb1_ref: (1, 1,  W+2, Cin)   halo row TH
    xb2_ref: (1, 1,  W+2, Cin)   halo row TH+1
    w_ref  : (9*Cin, Coutp)      [im2col path]   or (9, Cin, Coutp) [per-tap]
    b_ref  : (1, Coutp)
    o_ref  : (1, TH, W, Coutp)
    """
    TH = xa_ref.shape[1]
    Cin = xa_ref.shape[3]
    W = o_ref.shape[2]
    Coutp = o_ref.shape[3]

    # Stitch main block + 2 halo rows into the (TH+2, W+2, Cin) window.
    xp = jnp.concatenate([xa_ref[0], xb1_ref[0], xb2_ref[0]], axis=0)

    if use_im2col:
        # Pack the 9 taps along K: one well-shaped MXU matmul, K = 9*Cin,
        # M = TH*W, N = Coutp (lane axis), instead of 9 tiny K=Cin matmuls.
        cols = []
        for kh in range(3):
            row = xp[kh:kh + TH]                    # leading-dim slice (cheap)
            for kw in range(3):
                cols.append(row[:, kw:kw + W, :])   # (TH, W, Cin)
        patch = jnp.concatenate(cols, axis=-1).reshape(TH * W, 9 * Cin)
        acc = jnp.dot(patch, w_ref[...], preferred_element_type=jnp.float32)
    else:
        # Large-Cin path: K=Cin is already MXU-friendly; accumulate per tap.
        acc = jnp.zeros((TH * W, Coutp), jnp.float32)
        for kh in range(3):
            row = xp[kh:kh + TH]
            for kw in range(3):
                win = row[:, kw:kw + W, :].reshape(TH * W, Cin)
                acc = acc + jnp.dot(win, w_ref[kh * 3 + kw],
                                    preferred_element_type=jnp.float32)

    acc = jnp.maximum(acc + b_ref[...], 0.0)        # bias + ReLU (f32, lane-dense)
    o_ref[...] = acc.reshape(1, TH, W, Coutp).astype(o_ref.dtype)


def _pick_tile_h(H, W, Cin, Coutp, use_im2col, budget_bytes=6 << 20):
    """Largest row-tile TH that divides H, keeps >=2 tiles when the image is
    big enough (pipelining / megacore), and fits a conservative VMEM budget
    (inputs+outputs double-buffered + in-kernel temporaries)."""
    itemsize = 4
    cap = H if H < 16 else max(8, H // 2)
    best = 1
    for th in range(1, H + 1):
        if H % th or th > cap:
            continue
        xin = 2 * (th + 2) * (W + 2) * Cin * itemsize           # input + halo (x2 buf)
        xout = 2 * th * W * Coutp * itemsize                    # output (x2 buf)
        k = 9 * Cin if use_im2col else Cin
        tmp = th * W * (Coutp + k) * itemsize + (th + 2) * (W + 2) * Cin * itemsize
        if xin + xout + tmp <= budget_bytes:
            best = th
    return best


def conv_relu(x_nchw, weight, bias):
    """x_nchw: (N, Cin, H, W); weight: (Cout, Cin, 3, 3); bias: (Cout,).
    Returns (N, Cout, H, W), matching nn.Conv2d(in_, out, 3, padding=1) + ReLU."""
    N, Cin, H, W = x_nchw.shape
    Cout = weight.shape[0]

    # Lane-dense output channels only when the padding overhead is modest.
    if Cout % 128 == 0:
        Coutp = Cout
    elif Cout >= 96:
        Coutp = _round_up(Cout, 128)
    else:
        Coutp = _round_up(Cout, 8)

    use_im2col = Cin <= 32
    TH = _pick_tile_h(H, W, Cin, Coutp, use_im2col)
    HT = H // TH

    # NCHW -> NHWC + spatial zero-pad (padding=1), fused into one materialization.
    x_pad = jnp.pad(jnp.transpose(x_nchw, (0, 2, 3, 1)),
                    ((0, 0), (1, 1), (1, 1), (0, 0)))

    # (Cout, Cin, 3, 3) -> (9, Cin, Coutp), tap index = kh*3 + kw.
    w_t = jnp.transpose(weight, (2, 3, 1, 0)).reshape(9, Cin, Cout)
    if Coutp != Cout:
        w_t = jnp.pad(w_t, ((0, 0), (0, 0), (0, Coutp - Cout)))
        b_p = jnp.pad(bias, (0, Coutp - Cout))
    else:
        b_p = bias
    if use_im2col:
        w_arg = w_t.reshape(9 * Cin, Coutp)
        w_spec = pl.BlockSpec((9 * Cin, Coutp), lambda n, h: (0, 0))
    else:
        w_arg = w_t
        w_spec = pl.BlockSpec((9, Cin, Coutp), lambda n, h: (0, 0, 0))
    b_arg = b_p.reshape(1, Coutp)

    kernel = functools.partial(_conv_relu_kernel, use_im2col=use_im2col)

    # NOTE: pipeline_mode=pl.Buffered(3) on the activation specs is a further
    # knob once the grid is long; left at the default (2) to stay conservative.
    out_nhwc = pl.pallas_call(
        kernel,
        out_shape=jax.ShapeDtypeStruct((N, H, W, Coutp), x_nchw.dtype),
        grid_spec=pltpu.PrefetchScalarGridSpec(
            num_scalar_prefetch=0,
            grid=(N, HT),
            in_specs=[
                # main TH rows of padded input for this row-tile
                pl.BlockSpec((1, TH, W + 2, Cin), lambda n, h: (n, h, 0, 0)),
                # two 1-row halo blocks (rows h*TH+TH and h*TH+TH+1 of padded input)
                pl.BlockSpec((1, 1, W + 2, Cin), lambda n, h: (n, h * TH + TH, 0, 0)),
                pl.BlockSpec((1, 1, W + 2, Cin), lambda n, h: (n, h * TH + TH + 1, 0, 0)),
                w_spec,
                pl.BlockSpec((1, Coutp), lambda n, h: (0, 0)),
            ],
            out_specs=pl.BlockSpec((1, TH, W, Coutp), lambda n, h: (n, h, 0, 0)),
        ),
        compiler_params=pltpu.CompilerParams(
            dimension_semantics=("parallel", "parallel"),
            vmem_limit_bytes=32 * 1024 * 1024,
        ),
    )(x_pad, x_pad, x_pad, w_arg, b_arg)

    if Coutp != Cout:
        out_nhwc = out_nhwc[..., :Cout]
    return jnp.transpose(out_nhwc, (0, 3, 1, 2))  # back to NCHW


def _reference(x_nchw, weight, bias):
    out = jax.lax.conv_general_dilated(
        x_nchw, weight, window_strides=(1, 1), padding="SAME",
        dimension_numbers=("NCHW", "OIHW", "NCHW"),
    )
    out = out + bias.reshape(1, -1, 1, 1)
    return jnp.maximum(out, 0.0)


if __name__ == "__main__":
    key = jax.random.PRNGKey(0)
    kx, kw, kb = jax.random.split(key, 3)

    N, Cin, Cout, H, W = 2, 4, 8, 16, 16

    x = jax.random.normal(kx, (N, Cin, H, W), dtype=jnp.float32)
    # Deterministic PyTorch-like init: uniform(-bound, bound), bound = 1/sqrt(Cin*9).
    bound = 1.0 / (Cin * 9) ** 0.5
    weight = jax.random.uniform(kw, (Cout, Cin, 3, 3), jnp.float32, -bound, bound)
    bias = jax.random.uniform(kb, (Cout,), jnp.float32, -bound, bound)

    out = jax.block_until_ready(conv_relu(x, weight, bias))

    ref = _reference(x, weight, bias)
    assert out.shape == (N, Cout, H, W)
    assert jnp.allclose(out, ref, atol=1e-5, rtol=1e-5)

    print("KERNEL_OK")
</pallas_src>

<mosaic_0001>
module attributes {stable_mosaic.version = 11 : i64} {
  func.func @_conv_relu_kernel(%arg0: i32, %arg1: i32, %arg2: memref<1x8x18x4xf32, #tpu.memory_space<vmem>>, %arg3: memref<1x1x18x4xf32, #tpu.memory_space<vmem>>, %arg4: memref<1x1x18x4xf32, #tpu.memory_space<vmem>>, %arg5: memref<36x8xf32, #tpu.memory_space<vmem>>, %arg6: memref<1x8xf32, #tpu.memory_space<vmem>>, %arg7: memref<1x8x16x8xf32, #tpu.memory_space<vmem>>) attributes {dimension_semantics = [#tpu.dimension_semantics<parallel>, #tpu.dimension_semantics<parallel>], iteration_bounds = array<i64: 2, 2>, scalar_prefetch = 0 : i64, scratch_operands = 0 : i64, tpu.core_type = #tpu.core_type<tc>, window_params = [{transform_indices = @transform_0, window_bounds = array<i64: 1, 8, 18, 4>}, {transform_indices = @transform_1, window_bounds = array<i64: 1, 1, 18, 4>}, {transform_indices = @transform_2, window_bounds = array<i64: 1, 1, 18, 4>}, {pipeline_mode = #tpu.pipeline_mode<synchronous>, transform_indices = @transform_3, window_bounds = array<i64: 36, 8>}, {pipeline_mode = #tpu.pipeline_mode<synchronous>, transform_indices = @transform_4, window_bounds = array<i64: 1, 8>}, {transform_indices = @transform_5, window_bounds = array<i64: 1, 8, 16, 8>}]} {
    %c0 = arith.constant 0 : index
    %c0_0 = arith.constant 0 : index
    %c0_1 = arith.constant 0 : index
    %c0_2 = arith.constant 0 : index
    %0 = vector.load %arg2[%c0, %c0_0, %c0_1, %c0_2] : memref<1x8x18x4xf32, #tpu.memory_space<vmem>>, vector<1x8x18x4xf32>
    %1 = vector.shape_cast %0 : vector<1x8x18x4xf32> to vector<8x18x4xf32>
    %c0_3 = arith.constant 0 : index
    %c0_4 = arith.constant 0 : index
    %c0_5 = arith.constant 0 : index
    %c0_6 = arith.constant 0 : index
    %2 = vector.load %arg3[%c0_3, %c0_4, %c0_5, %c0_6] : memref<1x1x18x4xf32, #tpu.memory_space<vmem>>, vector<1x1x18x4xf32>
    %3 = vector.shape_cast %2 : vector<1x1x18x4xf32> to vector<1x18x4xf32>
    %c0_7 = arith.constant 0 : index
    %c0_8 = arith.constant 0 : index
    %c0_9 = arith.constant 0 : index
    %c0_10 = arith.constant 0 : index
    %4 = vector.load %arg4[%c0_7, %c0_8, %c0_9, %c0_10] : memref<1x1x18x4xf32, #tpu.memory_space<vmem>>, vector<1x1x18x4xf32>
    %5 = vector.shape_cast %4 : vector<1x1x18x4xf32> to vector<1x18x4xf32>
    %6 = tpu.concatenate %1, %3, %5 in 0 : vector<8x18x4xf32>, vector<1x18x4xf32>, vector<1x18x4xf32> -> vector<10x18x4xf32>
    %7 = vector.extract_strided_slice %6 {offsets = [0, 0, 0], sizes = [8, 18, 4], strides = [1, 1, 1]} : vector<10x18x4xf32> to vector<8x18x4xf32>
    %8 = vector.extract_strided_slice %7 {offsets = [0, 0, 0], sizes = [8, 16, 4], strides = [1, 1, 1]} : vector<8x18x4xf32> to vector<8x16x4xf32>
    %9 = vector.extract_strided_slice %7 {offsets = [0, 1, 0], sizes = [8, 16, 4], strides = [1, 1, 1]} : vector<8x18x4xf32> to vector<8x16x4xf32>
    %10 = vector.extract_strided_slice %7 {offsets = [0, 2, 0], sizes = [8, 16, 4], strides = [1, 1, 1]} : vector<8x18x4xf32> to vector<8x16x4xf32>
    %11 = vector.extract_strided_slice %6 {offsets = [1, 0, 0], sizes = [8, 18, 4], strides = [1, 1, 1]} : vector<10x18x4xf32> to vector<8x18x4xf32>
    %12 = vector.extract_strided_slice %11 {offsets = [0, 0, 0], sizes = [8, 16, 4], strides = [1, 1, 1]} : vector<8x18x4xf32> to vector<8x16x4xf32>
    %13 = vector.extract_strided_slice %11 {offsets = [0, 1, 0], sizes = [8, 16, 4], strides = [1, 1, 1]} : vector<8x18x4xf32> to vector<8x16x4xf32>
    %14 = vector.extract_strided_slice %11 {offsets = [0, 2, 0], sizes = [8, 16, 4], strides = [1, 1, 1]} : vector<8x18x4xf32> to vector<8x16x4xf32>
    %15 = vector.extract_strided_slice %6 {offsets = [2, 0, 0], sizes = [8, 18, 4], strides = [1, 1, 1]} : vector<10x18x4xf32> to vector<8x18x4xf32>
    %16 = vector.extract_strided_slice %15 {offsets = [0, 0, 0], sizes = [8, 16, 4], strides = [1, 1, 1]} : vector<8x18x4xf32> to vector<8x16x4xf32>
    %17 = vector.extract_strided_slice %15 {offsets = [0, 1, 0], sizes = [8, 16, 4], strides = [1, 1, 1]} : vector<8x18x4xf32> to vector<8x16x4xf32>
    %18 = vector.extract_strided_slice %15 {offsets = [0, 2, 0], sizes = [8, 16, 4], strides = [1, 1, 1]} : vector<8x18x4xf32> to vector<8x16x4xf32>
    %19 = tpu.concatenate %8, %9, %10, %12, %13, %14, %16, %17, %18 in 2 : vector<8x16x4xf32>, vector<8x16x4xf32>, vector<8x16x4xf32>, vector<8x16x4xf32>, vector<8x16x4xf32>, vector<8x16x4xf32>, vector<8x16x4xf32>, vector<8x16x4xf32>, vector<8x16x4xf32> -> vector<8x16x36xf32>
    %20 = vector.shape_cast %19 : vector<8x16x36xf32> to vector<128x36xf32>
    %c0_11 = arith.constant 0 : index
    %c0_12 = arith.constant 0 : index
    %21 = vector.load %arg5[%c0_11, %c0_12] : memref<36x8xf32, #tpu.memory_space<vmem>>, vector<36x8xf32>
    %cst = arith.constant dense<0.000000e+00> : vector<128x8xf32>
    %22 = tpu.matmul %20, %21, %cst {dimension_numbers = #tpu.dot_dimension_numbers<[1], [0], [0], [1], [0, 0, 1, 1], [], []>} : vector<128x36xf32>, vector<36x8xf32>, vector<128x8xf32> -> vector<128x8xf32>
    %c0_13 = arith.constant 0 : index
    %c0_14 = arith.constant 0 : index
    %23 = vector.load %arg6[%c0_13, %c0_14] : memref<1x8xf32, #tpu.memory_space<vmem>>, vector<1x8xf32>
    %24 = vector.broadcast %23 : vector<1x8xf32> to vector<128x8xf32>
    %25 = arith.addf %22, %24 : vector<128x8xf32>
    %cst_15 = arith.constant 0.000000e+00 : f32
    %26 = vector.broadcast %cst_15 : f32 to vector<128x8xf32>
    %27 = arith.maximumf %25, %26 : vector<128x8xf32>
    %28 = vector.shape_cast %27 : vector<128x8xf32> to vector<1x8x16x8xf32>
    %c0_16 = arith.constant 0 : index
    %c0_17 = arith.constant 0 : index
    %c0_18 = arith.constant 0 : index
    %c0_19 = arith.constant 0 : index
    %29 = vector.load %arg7[%c0_16, %c0_17, %c0_18, %c0_19] : memref<1x8x16x8xf32, #tpu.memory_space<vmem>>, vector<1x8x16x8xf32>
    tpu.vector_store %arg7[%c0_16, %c0_17, %c0_18, %c0_19], %28 {strides = array<i32>} : memref<1x8x16x8xf32, #tpu.memory_space<vmem>>, vector<1x8x16x8xf32>,
    return
  }
  func.func @transform_0(%arg0: i32, %arg1: i32) -> (i32, i32, i32, i32) {
    %c0_i32 = arith.constant 0 : i32
    %c0_i32_0 = arith.constant 0 : i32
    %c0_i32_1 = arith.constant 0 : i32
    return %arg0, %arg1, %c0_i32, %c0_i32_0 : i32, i32, i32, i32
  }
  func.func @transform_1(%arg0: i32, %arg1: i32) -> (i32, i32, i32, i32) {
    %c8_i32 = arith.constant 8 : i32
    %0 = arith.muli %arg1, %c8_i32 : i32
    %c8_i32_0 = arith.constant 8 : i32
    %1 = arith.addi %0, %c8_i32_0 : i32
    %c0_i32 = arith.constant 0 : i32
    %c0_i32_1 = arith.constant 0 : i32
    %c0_i32_2 = arith.constant 0 : i32
    return %arg0, %1, %c0_i32, %c0_i32_1 : i32, i32, i32, i32
  }
  func.func @transform_2(%arg0: i32, %arg1: i32) -> (i32, i32, i32, i32) {
    %c8_i32 = arith.constant 8 : i32
    %0 = arith.muli %arg1, %c8_i32 : i32
    %c8_i32_0 = arith.constant 8 : i32
    %1 = arith.addi %0, %c8_i32_0 : i32
    %c1_i32 = arith.constant 1 : i32
    %2 = arith.addi %1, %c1_i32 : i32
    %c0_i32 = arith.constant 0 : i32
    %c0_i32_1 = arith.constant 0 : i32
    %c0_i32_2 = arith.constant 0 : i32
    return %arg0, %2, %c0_i32, %c0_i32_1 : i32, i32, i32, i32
  }
  func.func @transform_3(%arg0: i32, %arg1: i32) -> (i32, i32) {
    %c0_i32 = arith.constant 0 : i32
    %c0_i32_0 = arith.constant 0 : i32
    %c0_i32_1 = arith.constant 0 : i32
    return %c0_i32, %c0_i32_0 : i32, i32
  }
  func.func @transform_4(%arg0: i32, %arg1: i32) -> (i32, i32) {
    %c0_i32 = arith.constant 0 : i32
    %c0_i32_0 = arith.constant 0 : i32
    %c0_i32_1 = arith.constant 0 : i32
    return %c0_i32, %c0_i32_0 : i32, i32
  }
  func.func @transform_5(%arg0: i32, %arg1: i32) -> (i32, i32, i32, i32) {
    %c0_i32 = arith.constant 0 : i32
    %c0_i32_0 = arith.constant 0 : i32
    %c0_i32_1 = arith.constant 0 : i32
    return %arg0, %arg1, %c0_i32, %c0_i32_0 : i32, i32, i32, i32
  }
}

</mosaic_0001>

<llo_original>
// kernel: tpu_custom_call.1
$region0: #{tpu_custom_call.1}
  #allocation0 [shape = 'u32[]', space=smem, size = 0x4, offset = 0x4, fixed_abs, tag = 'smem constant byte address 0x4 - core index']
  #allocation1 [shape = 'u32[72,128]{1,0:T(1,128)}', space=vmem, size = 0x9000, scoped, tag = 'internal scratch']
  %s0 = inlined_call_operand.vmem [shape: f32[2,18,18,4], index: 0, kind: input, shape index: {}]
  %s1 = inlined_call_operand.vmem [shape: f32[2,18,18,4], index: 1, kind: input, shape index: {}]
  %s2 = inlined_call_operand.vmem [shape: f32[2,18,18,4], index: 2, kind: input, shape index: {}]
  %s3 = inlined_call_operand.vmem [shape: f32[36,8], index: 3, kind: input, shape index: {}]
  %s4 = inlined_call_operand.vmem [shape: f32[1,8], index: 4, kind: input, shape index: {}]
  %s5 = inlined_call_operand.vmem [shape: f32[2,16,16,8], index: 5, kind: output, shape index: {}]
  %s6 = sld [smem:[#allocation0]]
  $region53: #{tpu_custom_call.1} parent=0
    _
  %s8 = ssub.s32 1, %s6
  %s9 = scalar_select 0, %s8, %s6
  loop: start=0, step=1, limit=6
  $region2: #{tpu_custom_call.1} parent=0 // loop_pre_header
    _
  $region3: #{tpu_custom_call.1} parent=0 // loop_header
    %s11 = sphi 0, %s15
    %p12 = scmp.ge.s32.totalorder %s11, 6
    %s18 = sphi 0, %s30
    %s19 = sphi 0, %s26
    %s20 = sphi 0, %s18
    %s21 = sphi 0, %s19
    %s22 = sphi 0, %s20
    %s23 = sphi 0, %s21
    %s35 = sphi 0, %s37
    %s38 = sphi 0, %s35
    %s39 = sphi 0, %s38
    %s55 = sphi 0, %s39
    %s67 = sphi 0, %s69
    %s70 = sphi 0, %s67
    %s71 = sphi 0, %s70
    %s87 = sphi 0, %s71
    %s99 = sphi 0, %s101
    %s102 = sphi 0, %s99
    %s103 = sphi 0, %s102
    %s119 = sphi 0, %s103
    %s123 = sphi 0, %s123
    %s125 = sphi 0, %s123
    %s126 = sphi 0, %s125
    %s140 = sphi 0, %s126
    %s144 = sphi 0, %s144
    %s146 = sphi 0, %s144
    %s147 = sphi 0, %s146
    %s161 = sphi 0, %s147
    %s169 = sphi 0, %s171
    %s172 = sphi 0, %s169
    %s173 = sphi 0, %s172
    %s189 = sphi 0, %s173
  $region4: #{tpu_custom_call.1} parent=0 // loop_header_branch
    %14 = sbr.rel (%p12) target = $region8
  $region5: #{tpu_custom_call.1} parent=0 // loop_body
    %s16 = ssub.s32 %s11, 1
    %s17 = ssub.s32 %s11, 2
    %s24 = sadd.s32 1, %s19
    %p25 = scmp.ge.s32.totalorder %s24, 2
    %s26 = scalar_select %p25, 0, %s24
    %s27 = sadd.s32 1, %s18
    %s28 = scalar_select %p25, %s27, %s18
    %p29 = scmp.ge.s32.totalorder %s28, 2
    %s30 = scalar_select %p29, 0, %s28
    %s31 = ssub.s32 %s18, %s30
    %s32 = ssub.s32 %s19, %s26
    %s33 = sor.u32 %s31, %s32
    %p34 = scmp.eq.s32.totalorder %s33, 0
    %s36 = sadd.s32 %s35, 1
    %s37 = scalar_select %p34, %s35, %s36
    %p40 = pneg %p34
    %p41 = scmp.eq.s32.totalorder %s11, 3
    %p42 = por %p40, %p41
    %p43 = scmp.ne.s32.totalorder %s35, %s38
    %p44 = scmp.eq.s32.totalorder %s11, 0
    %p45 = por %p43, %p44
    %p46 = scmp.ne.s32.totalorder %s35, %s38
    %p47 = scmp.eq.s32.totalorder %s16, 3
    %p48 = por %p46, %p47
    %p49 = scmp.ne.s32.totalorder %s38, %s39
    %p50 = scmp.eq.s32.totalorder %s16, 0
    %p51 = por %p49, %p50
    %p52 = scmp.ne.s32.totalorder %s38, %s39
    %p53 = scmp.eq.s32.totalorder %s17, 3
    %p54 = por %p52, %p53
    %p56 = scmp.ne.s32.totalorder %s39, %s55
    %p57 = scmp.eq.s32.totalorder %s17, 0
    %p58 = por %p56, %p57
    %s59 = smul.u32 %s19, 8
    %s60 = sadd.s32 %s59, 8
    %s61 = smul.u32 %s26, 8
    %s62 = sadd.s32 %s61, 8
    %s63 = ssub.s32 %s18, %s30
    %s64 = ssub.s32 %s60, %s62
    %s65 = sor.u32 %s63, %s64
    %p66 = scmp.eq.s32.totalorder %s65, 0
    %s68 = sadd.s32 %s67, 1
    %s69 = scalar_select %p66, %s67, %s68
    %p72 = pneg %p66
    %p73 = scmp.eq.s32.totalorder %s11, 3
    %p74 = por %p72, %p73
    %p75 = scmp.ne.s32.totalorder %s67, %s70
    %p76 = scmp.eq.s32.totalorder %s11, 0
    %p77 = por %p75, %p76
    %p78 = scmp.ne.s32.totalorder %s67, %s70
    %p79 = scmp.eq.s32.totalorder %s16, 3
    %p80 = por %p78, %p79
    %p81 = scmp.ne.s32.totalorder %s70, %s71
    %p82 = scmp.eq.s32.totalorder %s16, 0
    %p83 = por %p81, %p82
    %p84 = scmp.ne.s32.totalorder %s70, %s71
    %p85 = scmp.eq.s32.totalorder %s17, 3
    %p86 = por %p84, %p85
    %p88 = scmp.ne.s32.totalorder %s71, %s87
    %p89 = scmp.eq.s32.totalorder %s17, 0
    %p90 = por %p88, %p89
    %s91 = smul.u32 %s19, 8
    %s92 = sadd.s32 %s91, 9
    %s93 = smul.u32 %s26, 8
    %s94 = sadd.s32 %s93, 9
    %s95 = ssub.s32 %s18, %s30
    %s96 = ssub.s32 %s92, %s94
    %s97 = sor.u32 %s95, %s96
    %p98 = scmp.eq.s32.totalorder %s97, 0
    %s100 = sadd.s32 %s99, 1
    %s101 = scalar_select %p98, %s99, %s100
    %p104 = pneg %p98
    %p105 = scmp.eq.s32.totalorder %s11, 3
    %p106 = por %p104, %p105
    %p107 = scmp.ne.s32.totalorder %s99, %s102
    %p108 = scmp.eq.s32.totalorder %s11, 0
    %p109 = por %p107, %p108
    %p110 = scmp.ne.s32.totalorder %s99, %s102
    %p111 = scmp.eq.s32.totalorder %s16, 3
    %p112 = por %p110, %p111
    %p113 = scmp.ne.s32.totalorder %s102, %s103
    %p114 = scmp.eq.s32.totalorder %s16, 0
    %p115 = por %p113, %p114
    %p116 = scmp.ne.s32.totalorder %s102, %s103
    %p117 = scmp.eq.s32.totalorder %s17, 3
    %p118 = por %p116, %p117
    %p120 = scmp.ne.s32.totalorder %s103, %s119
    %p121 = scmp.eq.s32.totalorder %s17, 0
    %p122 = por %p120, %p121
    %s124 = sadd.s32 %s123, 1
    %p127 = scmp.eq.s32.totalorder %s11, 3
    %p128 = scmp.ne.s32.totalorder %s123, %s125
    %p129 = scmp.eq.s32.totalorder %s11, 0
    %p130 = por %p128, %p129
    %p131 = scmp.ne.s32.totalorder %s123, %s125
    %p132 = scmp.eq.s32.totalorder %s16, 3
    %p133 = por %p131, %p132
    %p134 = scmp.ne.s32.totalorder %s125, %s126
    %p135 = scmp.eq.s32.totalorder %s16, 0
    %p136 = por %p134, %p135
    %p137 = scmp.ne.s32.totalorder %s125, %s126
    %p138 = scmp.eq.s32.totalorder %s17, 3
    %p139 = por %p137, %p138
    %p141 = scmp.ne.s32.totalorder %s126, %s140
    %p142 = scmp.eq.s32.totalorder %s17, 0
    %p143 = por %p141, %p142
    %s145 = sadd.s32 %s144, 1
    %p148 = scmp.eq.s32.totalorder %s11, 3
    %p149 = scmp.ne.s32.totalorder %s144, %s146
    %p150 = scmp.eq.s32.totalorder %s11, 0
    %p151 = por %p149, %p150
    %p152 = scmp.ne.s32.totalorder %s144, %s146
    %p153 = scmp.eq.s32.totalorder %s16, 3
    %p154 = por %p152, %p153
    %p155 = scmp.ne.s32.totalorder %s146, %s147
    %p156 = scmp.eq.s32.totalorder %s16, 0
    %p157 = por %p155, %p156
    %p158 = scmp.ne.s32.totalorder %s146, %s147
    %p159 = scmp.eq.s32.totalorder %s17, 3
    %p160 = por %p158, %p159
    %p162 = scmp.ne.s32.totalorder %s147, %s161
    %p163 = scmp.eq.s32.totalorder %s17, 0
    %p164 = por %p162, %p163
    %s165 = ssub.s32 %s18, %s30
    %s166 = ssub.s32 %s19, %s26
    %s167 = sor.u32 %s165, %s166
    %p168 = scmp.eq.s32.totalorder %s167, 0
    %s170 = sadd.s32 %s169, 1
    %s171 = scalar_select %p168, %s169, %s170
    %p174 = pneg %p168
    %p175 = scmp.eq.s32.totalorder %s11, 3
    %p176 = por %p174, %p175
    %p177 = scmp.ne.s32.totalorder %s169, %s172
    %p178 = scmp.eq.s32.totalorder %s11, 0
    %p179 = por %p177, %p178
    %p180 = scmp.ne.s32.totalorder %s169, %s172
    %p181 = scmp.eq.s32.totalorder %s16, 3
    %p182 = por %p180, %p181
    %p183 = scmp.ne.s32.totalorder %s172, %s173
    %p184 = scmp.eq.s32.totalorder %s16, 0
    %p185 = por %p183, %p184
    %p186 = scmp.ne.s32.totalorder %s172, %s173
    %p187 = scmp.eq.s32.totalorder %s17, 3
    %p188 = por %p186, %p187
    %p190 = scmp.ne.s32.totalorder %s173, %s189
    %p191 = scmp.eq.s32.totalorder %s17, 0
    %p192 = por %p190, %p191
    %p193 = scmp.le.s32.totalorder 1, %s11
    %p194 = scmp.lt.s32.totalorder %s11, 5
    %p195 = pnand %p193, %p194
    %p196 = pneg %p195
    // Predicated region
    $region9: #{tpu_custom_call.1} parent=5 // pred_check
      _
    $region10: #{tpu_custom_call.1} parent=5 // pred_check_branch
      %198 = sbr.rel (%p195) target = $region12
    $region11: #{tpu_custom_call.1} parent=5 // pred_region
      %s199 = ssub.s32 %s11, 1
      // Predicated region
      $region13: #{tpu_custom_call.1} parent=11 // pred_check
        %p200 = pneg %p136
      $region14: #{tpu_custom_call.1} parent=11 // pred_check_branch
        %202 = sbr.rel (%p200) target = $region16
      $region15: #{tpu_custom_call.1} parent=11 // pred_region
        _
      $region16: #{tpu_custom_call.1} parent=11 // pred_fallthru
        _
      // Predicated region
      $region17: #{tpu_custom_call.1} parent=11 // pred_check
        %p203 = pneg %p157
      $region18: #{tpu_custom_call.1} parent=11 // pred_check_branch
        %205 = sbr.rel (%p203) target = $region20
      $region19: #{tpu_custom_call.1} parent=11 // pred_region
        _
      $region20: #{tpu_custom_call.1} parent=11 // pred_fallthru
        _
    $region12: #{tpu_custom_call.1} parent=5 // pred_fallthru
      _
    %p206 = scmp.lt.s32.totalorder %s11, 4
    // Predicated region
    $region21: #{tpu_custom_call.1} parent=5 // pred_check
      %p207 = pneg %p206
    $region22: #{tpu_custom_call.1} parent=5 // pred_check_branch
      %209 = sbr.rel (%p207) target = $region24
    $region23: #{tpu_custom_call.1} parent=5 // pred_region
      // Predicated region
      $region25: #{tpu_custom_call.1} parent=23 // pred_check
        %p210 = pneg %p45
      $region26: #{tpu_custom_call.1} parent=23 // pred_check_branch
        %212 = sbr.rel (%p210) target = $region28
      $region27: #{tpu_custom_call.1} parent=23 // pred_region
        %s213 = smul.u32 8, %s19
        %s214 = ssub.s32 18, %s213
        %p215 = scmp.lt.s32.totalorder %s214, 8
        %s216 = scalar_select %p215, %s214, 8
        %s217 = smul.u32 8, %s216
        %s218 = smul.u32 %s217, 3
        %p219 = scmp.lt.s32.totalorder %s18, 1
        %s220 = scalar_select %p219, %s18, 1
        %p221 = scmp.lt.s32.totalorder %s213, 17
        %s222 = scalar_select %p221, %s213, 17
        %s223 = smul.addr %s222, 3
        %s224 = smul.addr %s220, 54
        %s225 = sadd.s32 %s223, %s224
        %s226 = smul.addr %s225, 8
        %s227 = scalar_lea.vmem %s0, %s226
        %s228 = smul.u32 8, %s19
        %s229 = ssub.s32 18, %s228
        %p230 = scmp.lt.s32.totalorder %s229, 8
        %s231 = scalar_select %p230, %s229, 8
        %s232 = smul.u32 8, %s231
        %s233 = smul.u32 %s232, 3
      $region28: #{tpu_custom_call.1} parent=23 // pred_fallthru
        _
      // Predicated region
      $region29: #{tpu_custom_call.1} parent=23 // pred_check
        %p234 = pneg %p77
      $region30: #{tpu_custom_call.1} parent=23 // pred_check_branch
        %236 = sbr.rel (%p234) target = $region32
      $region31: #{tpu_custom_call.1} parent=23 // pred_region
        %s237 = smul.u32 %s19, 8
        %s238 = sadd.s32 %s237, 8
        %p239 = scmp.lt.s32.totalorder %s18, 1
        %s240 = scalar_select %p239, %s18, 1
        %p241 = scmp.lt.s32.totalorder %s238, 17
        %s242 = scalar_select %p241, %s238, 17
        %s243 = smul.addr %s242, 3
        %s244 = smul.addr %s240, 54
        %s245 = sadd.s32 %s243, %s244
        %s246 = smul.addr %s245, 8
        %s247 = scalar_lea.vmem %s1, %s246
        %s248 = smul.u32 %s19, 8
        %s249 = sadd.s32 %s248, 8
      $region32: #{tpu_custom_call.1} parent=23 // pred_fallthru
        _
      // Predicated region
      $region33: #{tpu_custom_call.1} parent=23 // pred_check
        %p250 = pneg %p109
      $region34: #{tpu_custom_call.1} parent=23 // pred_check_branch
        %252 = sbr.rel (%p250) target = $region36
      $region35: #{tpu_custom_call.1} parent=23 // pred_region
        %s253 = smul.u32 %s19, 8
        %s254 = sadd.s32 %s253, 9
        %p255 = scmp.lt.s32.totalorder %s18, 1
        %s256 = scalar_select %p255, %s18, 1
        %p257 = scmp.lt.s32.totalorder %s254, 17
        %s258 = scalar_select %p257, %s254, 17
        %s259 = smul.addr %s258, 3
        %s260 = smul.addr %s256, 54
        %s261 = sadd.s32 %s259, %s260
        %s262 = smul.addr %s261, 8
        %s263 = scalar_lea.vmem %s2, %s262
        %s264 = smul.u32 %s19, 8
        %s265 = sadd.s32 %s264, 9
      $region36: #{tpu_custom_call.1} parent=23 // pred_fallthru
        _
    $region24: #{tpu_custom_call.1} parent=5 // pred_fallthru
      _
    %p266 = scmp.le.s32.totalorder 1, %s11
    %p267 = scmp.lt.s32.totalorder %s11, 5
    %p268 = pnand %p266, %p267
    %p269 = pneg %p268
    // Predicated region
    $region37: #{tpu_custom_call.1} parent=5 // pred_check
      _
    $region38: #{tpu_custom_call.1} parent=5 // pred_check_branch
      %271 = sbr.rel (%p268) target = $region40
    $region39: #{tpu_custom_call.1} parent=5 // pred_region
      %s272 = ssub.s32 %s11, 1
      %s273 = smul.u32 8, %s21
      %s274 = ssub.s32 18, %s273
      %p275 = scmp.lt.s32.totalorder %s274, 8
      %s276 = scalar_select %p275, %s274, 8
      %s277 = smul.u32 8, %s276
      %s278 = smul.u32 %s277, 3
      %p279 = scmp.lt.s32.totalorder %s20, 1
      %s280 = scalar_select %p279, %s20, 1
      %p281 = scmp.lt.s32.totalorder %s273, 17
      %s282 = scalar_select %p281, %s273, 17
      %s283 = smul.addr %s282, 3
      %s284 = smul.addr %s280, 54
      %s285 = sadd.s32 %s283, %s284
      %s286 = smul.addr %s285, 8
      %s287 = scalar_lea.vmem %s0, %s286
      %p288 = pneg %p51
      %p289 = pneg %p48
      %s290 = smul.u32 %s21, 8
      %s291 = sadd.s32 %s290, 8
      %p292 = scmp.lt.s32.totalorder %s20, 1
      %s293 = scalar_select %p292, %s20, 1
      %p294 = scmp.lt.s32.totalorder %s291, 17
      %s295 = scalar_select %p294, %s291, 17
      %s296 = smul.addr %s295, 3
      %s297 = smul.addr %s293, 54
      %s298 = sadd.s32 %s296, %s297
      %s299 = smul.addr %s298, 8
      %s300 = scalar_lea.vmem %s1, %s299
      %p301 = pneg %p83
      %p302 = pneg %p80
      %s303 = smul.u32 %s21, 8
      %s304 = sadd.s32 %s303, 9
      %p305 = scmp.lt.s32.totalorder %s20, 1
      %s306 = scalar_select %p305, %s20, 1
      %p307 = scmp.lt.s32.totalorder %s304, 17
      %s308 = scalar_select %p307, %s304, 17
      %s309 = smul.addr %s308, 3
      %s310 = smul.addr %s306, 54
      %s311 = sadd.s32 %s309, %s310
      %s312 = smul.addr %s311, 8
      %s313 = scalar_lea.vmem %s2, %s312
      %p314 = pneg %p115
      %p315 = pneg %p112
      %p316 = pneg %p136
      %p317 = pneg %p133
      %p318 = pneg %p157
      %p319 = pneg %p154
      %p320 = pneg %p185
      %p321 = pneg %p182
      %s322 = smul.u32 8, %s21
      %p323 = scmp.lt.s32.totalorder %s20, 1
      %s324 = scalar_select %p323, %s20, 1
      %p325 = scmp.lt.s32.totalorder %s322, 15
      %s326 = scalar_select %p325, %s322, 15
      %s327 = smul.addr %s326, 2
      %s328 = smul.addr %s324, 32
      %s329 = sadd.s32 %s327, %s328
      %s330 = smul.addr %s329, 8
      %s331 = scalar_lea.vmem %s5, %s330
      %s332 = smul.u32 8, %s21
      %s333 = ssub.s32 18, %s332
      %p334 = scmp.lt.s32.totalorder %s333, 8
      %s335 = scalar_select %p334, %s333, 8
      %s336 = smul.u32 8, %s335
      %s337 = smul.u32 %s336, 3
      %p338 = scmp.lt.s32.totalorder %s20, 1
      %s339 = scalar_select %p338, %s20, 1
      %p340 = scmp.lt.s32.totalorder %s332, 17
      %s341 = scalar_select %p340, %s332, 17
      %s342 = smul.addr %s341, 3
      %s343 = smul.addr %s339, 54
      %s344 = sadd.s32 %s342, %s343
      %s345 = smul.addr %s344, 8
      %s346 = scalar_lea.vmem %s0, %s345
      %s347 = smul.u32 8, %s21
      %s348 = ssub.s32 18, %s347
      %p349 = scmp.lt.s32.totalorder %s348, 8
      %s350 = scalar_select %p349, %s348, 8
      %s351 = smul.u32 8, %s350
      %s352 = smul.u32 %s351, 3
      %s353 = smul.u32 %s21, 8
      %s354 = sadd.s32 %s353, 8
      %p355 = scmp.lt.s32.totalorder %s20, 1
      %s356 = scalar_select %p355, %s20, 1
      %p357 = scmp.lt.s32.totalorder %s354, 17
      %s358 = scalar_select %p357, %s354, 17
      %s359 = smul.addr %s358, 3
      %s360 = smul.addr %s356, 54
      %s361 = sadd.s32 %s359, %s360
      %s362 = smul.addr %s361, 8
      %s363 = scalar_lea.vmem %s1, %s362
      %s364 = smul.u32 %s21, 8
      %s365 = sadd.s32 %s364, 8
      %s366 = smul.u32 %s21, 8
      %s367 = sadd.s32 %s366, 9
      %p368 = scmp.lt.s32.totalorder %s20, 1
      %s369 = scalar_select %p368, %s20, 1
      %p370 = scmp.lt.s32.totalorder %s367, 17
      %s371 = scalar_select %p370, %s367, 17
      %s372 = smul.addr %s371, 3
      %s373 = smul.addr %s369, 54
      %s374 = sadd.s32 %s372, %s373
      %s375 = smul.addr %s374, 8
      %s376 = scalar_lea.vmem %s2, %s375
      %s377 = smul.u32 %s21, 8
      %s378 = sadd.s32 %s377, 9
      %s379 = smul.u32 8, %s21
      %p380 = scmp.lt.s32.totalorder %s20, 1
      %s381 = scalar_select %p380, %s20, 1
      %p382 = scmp.lt.s32.totalorder %s379, 15
      %s383 = scalar_select %p382, %s379, 15
      %s384 = smul.addr %s383, 2
      %s385 = smul.addr %s381, 32
      %s386 = sadd.s32 %s384, %s385
      %s387 = smul.addr %s386, 8
      %s388 = scalar_lea.vmem %s5, %s387
      %s389 = smul.u32 8, %s21
      %v390 = vld [vmem:[%s346] sm:$0xff]
      %v391 = vld [vmem:[%s346 + $0x8] sm:$0xff]
      %v392 = vld [vmem:[%s346 + $0x10] sm:$0x3]
      %v393 = vld [vmem:[%s346 + $0x18] sm:$0xff]
      %v394 = vld [vmem:[%s346 + $0x20] sm:$0xff]
      %v395 = vld [vmem:[%s346 + $0x28] sm:$0x3]
      %v396 = vld [vmem:[%s346 + $0x30] sm:$0xff]
      %v397 = vld [vmem:[%s346 + $0x38] sm:$0xff]
      %v398 = vld [vmem:[%s346 + $0x40] sm:$0x3]
      %v399 = vld [vmem:[%s346 + $0x48] sm:$0xff]
      %v400 = vld [vmem:[%s346 + $0x50] sm:$0xff]
      %v401 = vld [vmem:[%s346 + $0x58] sm:$0x3]
      %v402 = vld [vmem:[%s346 + $0x60] sm:$0xff]
      %v403 = vld [vmem:[%s346 + $0x68] sm:$0xff]
      %v404 = vld [vmem:[%s346 + $0x70] sm:$0x3]
      %v405 = vld [vmem:[%s346 + $0x78] sm:$0xff]
      %v406 = vld [vmem:[%s346 + $0x80] sm:$0xff]
      %v407 = vld [vmem:[%s346 + $0x88] sm:$0x3]
      %v408 = vld [vmem:[%s346 + $0x90] sm:$0xff]
      %v409 = vld [vmem:[%s346 + $0x98] sm:$0xff]
      %v410 = vld [vmem:[%s346 + $0xa0] sm:$0x3]
      %v411 = vld [vmem:[%s346 + $0xa8] sm:$0xff]
      %v412 = vld [vmem:[%s346 + $0xb0] sm:$0xff]
      %v413 = vld [vmem:[%s346 + $0xb8] sm:$0x3]
      %v414 = vld [vmem:[%s363] sm:$0xff]
      %v415 = vld [vmem:[%s363 + $0x8] sm:$0xff]
      %v416 = vld [vmem:[%s363 + $0x10] sm:$0x3]
      %v417 = vld [vmem:[%s376] sm:$0xff]
      %v418 = vld [vmem:[%s376 + $0x8] sm:$0xff]
      %v419 = vld [vmem:[%s376 + $0x10] sm:$0x3]
      %vm444 = vcmask 1046528
      %v445 = vrot.slane %v390, 1
      %v446 = vrot.slane %v391, 1
      %v447 = vsel %vm444, %v445, %v446
      %v448 = vrot.slane %v392, 1
      %v449 = vsel %vm444, %v446, %v448
      %v450 = vrot.slane %v393, 1
      %v451 = vrot.slane %v394, 1
      %v452 = vsel %vm444, %v450, %v451
      %v453 = vrot.slane %v395, 1
      %v454 = vsel %vm444, %v451, %v453
      %v455 = vrot.slane %v396, 1
      %v456 = vrot.slane %v397, 1
      %v457 = vsel %vm444, %v455, %v456
      %v458 = vrot.slane %v398, 1
      %v459 = vsel %vm444, %v456, %v458
      %v460 = vrot.slane %v399, 1
      %v461 = vrot.slane %v400, 1
      %v462 = vsel %vm444, %v460, %v461
      %v463 = vrot.slane %v401, 1
      %v464 = vsel %vm444, %v461, %v463
      %v465 = vrot.slane %v402, 1
      %v466 = vrot.slane %v403, 1
      %v467 = vsel %vm444, %v465, %v466
      %v468 = vrot.slane %v404, 1
      %v469 = vsel %vm444, %v466, %v468
      %v470 = vrot.slane %v405, 1
      %v471 = vrot.slane %v406, 1
      %v472 = vsel %vm444, %v470, %v471
      %v473 = vrot.slane %v407, 1
      %v474 = vsel %vm444, %v471, %v473
      %v475 = vrot.slane %v408, 1
      %v476 = vrot.slane %v409, 1
      %v477 = vsel %vm444, %v475, %v476
      %v478 = vrot.slane %v410, 1
      %v479 = vsel %vm444, %v476, %v478
      %v480 = vrot.slane %v411, 1
      %v481 = vrot.slane %v412, 1
      %v482 = vsel %vm444, %v480, %v481
      %v483 = vrot.slane %v413, 1
      %v484 = vsel %vm444, %v481, %v483
      %485 = vrot.lane.b32.xlu0 %v447, 4
      %v486 = vpop.permute.xlu0 %485
      %487 = vrot.lane.b32.xlu0 %v449, 4
      %v488 = vpop.permute.xlu0 %487
      %489 = vrot.lane.b32.xlu0 %v452, 4
      %v490 = vpop.permute.xlu0 %489
      %491 = vrot.lane.b32.xlu0 %v454, 4
      %v492 = vpop.permute.xlu0 %491
      %493 = vrot.lane.b32.xlu0 %v457, 4
      %v494 = vpop.permute.xlu0 %493
      %495 = vrot.lane.b32.xlu0 %v459, 4
      %v496 = vpop.permute.xlu0 %495
      %497 = vrot.lane.b32.xlu0 %v462, 4
      %v498 = vpop.permute.xlu0 %497
      %499 = vrot.lane.b32.xlu0 %v464, 4
      %v500 = vpop.permute.xlu0 %499
      %501 = vrot.lane.b32.xlu0 %v467, 4
      %v502 = vpop.permute.xlu0 %501
      %503 = vrot.lane.b32.xlu0 %v469, 4
      %v504 = vpop.permute.xlu0 %503
      %505 = vrot.lane.b32.xlu0 %v472, 4
      %v506 = vpop.permute.xlu0 %505
      %507 = vrot.lane.b32.xlu0 %v474, 4
      %v508 = vpop.permute.xlu0 %507
      %509 = vrot.lane.b32.xlu0 %v477, 4
      %v510 = vpop.permute.xlu0 %509
      %511 = vrot.lane.b32.xlu0 %v479, 4
      %v512 = vpop.permute.xlu0 %511
      %513 = vrot.lane.b32.xlu0 %v482, 4
      %v514 = vpop.permute.xlu0 %513
      %515 = vrot.lane.b32.xlu0 %v484, 4
      %v516 = vpop.permute.xlu0 %515
      %vm533 = vcmask 1045504
      %v534 = vrot.slane %v390, 2
      %v535 = vrot.slane %v391, 2
      %v536 = vsel %vm533, %v534, %v535
      %v537 = vrot.slane %v392, 2
      %v538 = vsel %vm533, %v535, %v537
      %v539 = vrot.slane %v393, 2
      %v540 = vrot.slane %v394, 2
      %v541 = vsel %vm533, %v539, %v540
      %v542 = vrot.slane %v395, 2
      %v543 = vsel %vm533, %v540, %v542
      %v544 = vrot.slane %v396, 2
      %v545 = vrot.slane %v397, 2
      %v546 = vsel %vm533, %v544, %v545
      %v547 = vrot.slane %v398, 2
      %v548 = vsel %vm533, %v545, %v547
      %v549 = vrot.slane %v399, 2
      %v550 = vrot.slane %v400, 2
      %v551 = vsel %vm533, %v549, %v550
      %v552 = vrot.slane %v401, 2
      %v553 = vsel %vm533, %v550, %v552
      %v554 = vrot.slane %v402, 2
      %v555 = vrot.slane %v403, 2
      %v556 = vsel %vm533, %v554, %v555
      %v557 = vrot.slane %v404, 2
      %v558 = vsel %vm533, %v555, %v557
      %v559 = vrot.slane %v405, 2
      %v560 = vrot.slane %v406, 2
      %v561 = vsel %vm533, %v559, %v560
      %v562 = vrot.slane %v407, 2
      %v563 = vsel %vm533, %v560, %v562
      %v564 = vrot.slane %v408, 2
      %v565 = vrot.slane %v409, 2
      %v566 = vsel %vm533, %v564, %v565
      %v567 = vrot.slane %v410, 2
      %v568 = vsel %vm533, %v565, %v567
      %v569 = vrot.slane %v411, 2
      %v570 = vrot.slane %v412, 2
      %v571 = vsel %vm533, %v569, %v570
      %v572 = vrot.slane %v413, 2
      %v573 = vsel %vm533, %v570, %v572
      %574 = vrot.lane.b32.xlu0 %v536, 8
      %v575 = vpop.permute.xlu0 %574
      %576 = vrot.lane.b32.xlu0 %v538, 8
      %v577 = vpop.permute.xlu0 %576
      %578 = vrot.lane.b32.xlu0 %v541, 8
      %v579 = vpop.permute.xlu0 %578
      %580 = vrot.lane.b32.xlu0 %v543, 8
      %v581 = vpop.permute.xlu0 %580
      %582 = vrot.lane.b32.xlu0 %v546, 8
      %v583 = vpop.permute.xlu0 %582
      %584 = vrot.lane.b32.xlu0 %v548, 8
      %v585 = vpop.permute.xlu0 %584
      %586 = vrot.lane.b32.xlu0 %v551, 8
      %v587 = vpop.permute.xlu0 %586
      %588 = vrot.lane.b32.xlu0 %v553, 8
      %v589 = vpop.permute.xlu0 %588
      %590 = vrot.lane.b32.xlu0 %v556, 8
      %v591 = vpop.permute.xlu0 %590
      %592 = vrot.lane.b32.xlu0 %v558, 8
      %v593 = vpop.permute.xlu0 %592
      %594 = vrot.lane.b32.xlu0 %v561, 8
      %v595 = vpop.permute.xlu0 %594
      %596 = vrot.lane.b32.xlu0 %v563, 8
      %v597 = vpop.permute.xlu0 %596
      %598 = vrot.lane.b32.xlu0 %v566, 8
      %v599 = vpop.permute.xlu0 %598
      %600 = vrot.lane.b32.xlu0 %v568, 8
      %v601 = vpop.permute.xlu0 %600
      %602 = vrot.lane.b32.xlu0 %v571, 8
      %v603 = vpop.permute.xlu0 %602
      %604 = vrot.lane.b32.xlu0 %v573, 8
      %v605 = vpop.permute.xlu0 %604
      %624 = vrot.lane.b32.xlu0 %v393, 12
      %v625 = vpop.permute.xlu0 %624
      %626 = vrot.lane.b32.xlu0 %v394, 12
      %v627 = vpop.permute.xlu0 %626
      %628 = vrot.lane.b32.xlu0 %v396, 12
      %v629 = vpop.permute.xlu0 %628
      %630 = vrot.lane.b32.xlu0 %v397, 12
      %v631 = vpop.permute.xlu0 %630
      %632 = vrot.lane.b32.xlu0 %v399, 12
      %v633 = vpop.permute.xlu0 %632
      %634 = vrot.lane.b32.xlu0 %v400, 12
      %v635 = vpop.permute.xlu0 %634
      %636 = vrot.lane.b32.xlu0 %v402, 12
      %v637 = vpop.permute.xlu0 %636
      %638 = vrot.lane.b32.xlu0 %v403, 12
      %v639 = vpop.permute.xlu0 %638
      %640 = vrot.lane.b32.xlu0 %v405, 12
      %v641 = vpop.permute.xlu0 %640
      %642 = vrot.lane.b32.xlu0 %v406, 12
      %v643 = vpop.permute.xlu0 %642
      %644 = vrot.lane.b32.xlu0 %v408, 12
      %v645 = vpop.permute.xlu0 %644
      %646 = vrot.lane.b32.xlu0 %v409, 12
      %v647 = vpop.permute.xlu0 %646
      %648 = vrot.lane.b32.xlu0 %v411, 12
      %v649 = vpop.permute.xlu0 %648
      %650 = vrot.lane.b32.xlu0 %v412, 12
      %v651 = vpop.permute.xlu0 %650
      %652 = vrot.lane.b32.xlu0 %v414, 12
      %v653 = vpop.permute.xlu0 %652
      %654 = vrot.lane.b32.xlu0 %v415, 12
      %v655 = vpop.permute.xlu0 %654
      %v673 = vrot.slane %v414, 1
      %v674 = vrot.slane %v415, 1
      %v675 = vsel %vm444, %v673, %v674
      %v676 = vrot.slane %v416, 1
      %v677 = vsel %vm444, %v674, %v676
      %678 = vrot.lane.b32.xlu0 %v452, 16
      %v679 = vpop.permute.xlu0 %678
      %680 = vrot.lane.b32.xlu0 %v454, 16
      %v681 = vpop.permute.xlu0 %680
      %682 = vrot.lane.b32.xlu0 %v457, 16
      %v683 = vpop.permute.xlu0 %682
      %684 = vrot.lane.b32.xlu0 %v459, 16
      %v685 = vpop.permute.xlu0 %684
      %686 = vrot.lane.b32.xlu0 %v462, 16
      %v687 = vpop.permute.xlu0 %686
      %688 = vrot.lane.b32.xlu0 %v464, 16
      %v689 = vpop.permute.xlu0 %688
      %690 = vrot.lane.b32.xlu0 %v467, 16
      %v691 = vpop.permute.xlu0 %690
      %692 = vrot.lane.b32.xlu0 %v469, 16
      %v693 = vpop.permute.xlu0 %692
      %694 = vrot.lane.b32.xlu0 %v472, 16
      %v695 = vpop.permute.xlu0 %694
      %696 = vrot.lane.b32.xlu0 %v474, 16
      %v697 = vpop.permute.xlu0 %696
      %698 = vrot.lane.b32.xlu0 %v477, 16
      %v699 = vpop.permute.xlu0 %698
      %700 = vrot.lane.b32.xlu0 %v479, 16
      %v701 = vpop.permute.xlu0 %700
      %702 = vrot.lane.b32.xlu0 %v482, 16
      %v703 = vpop.permute.xlu0 %702
      %704 = vrot.lane.b32.xlu0 %v484, 16
      %v705 = vpop.permute.xlu0 %704
      %706 = vrot.lane.b32.xlu0 %v675, 16
      %v707 = vpop.permute.xlu0 %706
      %708 = vrot.lane.b32.xlu0 %v677, 16
      %v709 = vpop.permute.xlu0 %708
      %v726 = vrot.slane %v414, 2
      %v727 = vrot.slane %v415, 2
      %v728 = vsel %vm533, %v726, %v727
      %v729 = vrot.slane %v416, 2
      %v730 = vsel %vm533, %v727, %v729
      %731 = vrot.lane.b32.xlu0 %v541, 20
      %v732 = vpop.permute.xlu0 %731
      %733 = vrot.lane.b32.xlu0 %v543, 20
      %v734 = vpop.permute.xlu0 %733
      %735 = vrot.lane.b32.xlu0 %v546, 20
      %v736 = vpop.permute.xlu0 %735
      %737 = vrot.lane.b32.xlu0 %v548, 20
      %v738 = vpop.permute.xlu0 %737
      %739 = vrot.lane.b32.xlu0 %v551, 20
      %v740 = vpop.permute.xlu0 %739
      %741 = vrot.lane.b32.xlu0 %v553, 20
      %v742 = vpop.permute.xlu0 %741
      %743 = vrot.lane.b32.xlu0 %v556, 20
      %v744 = vpop.permute.xlu0 %743
      %745 = vrot.lane.b32.xlu0 %v558, 20
      %v746 = vpop.permute.xlu0 %745
      %747 = vrot.lane.b32.xlu0 %v561, 20
      %v748 = vpop.permute.xlu0 %747
      %749 = vrot.lane.b32.xlu0 %v563, 20
      %v750 = vpop.permute.xlu0 %749
      %751 = vrot.lane.b32.xlu0 %v566, 20
      %v752 = vpop.permute.xlu0 %751
      %753 = vrot.lane.b32.xlu0 %v568, 20
      %v754 = vpop.permute.xlu0 %753
      %755 = vrot.lane.b32.xlu0 %v571, 20
      %v756 = vpop.permute.xlu0 %755
      %757 = vrot.lane.b32.xlu0 %v573, 20
      %v758 = vpop.permute.xlu0 %757
      %759 = vrot.lane.b32.xlu0 %v728, 20
      %v760 = vpop.permute.xlu0 %759
      %761 = vrot.lane.b32.xlu0 %v730, 20
      %v762 = vpop.permute.xlu0 %761
      %781 = vrot.lane.b32.xlu0 %v396, 24
      %v782 = vpop.permute.xlu0 %781
      %783 = vrot.lane.b32.xlu0 %v397, 24
      %v784 = vpop.permute.xlu0 %783
      %785 = vrot.lane.b32.xlu0 %v399, 24
      %v786 = vpop.permute.xlu0 %785
      %787 = vrot.lane.b32.xlu0 %v400, 24
      %v788 = vpop.permute.xlu0 %787
      %789 = vrot.lane.b32.xlu0 %v402, 24
      %v790 = vpop.permute.xlu0 %789
      %791 = vrot.lane.b32.xlu0 %v403, 24
      %v792 = vpop.permute.xlu0 %791
      %793 = vrot.lane.b32.xlu0 %v405, 24
      %v794 = vpop.permute.xlu0 %793
      %795 = vrot.lane.b32.xlu0 %v406, 24
      %v796 = vpop.permute.xlu0 %795
      %797 = vrot.lane.b32.xlu0 %v408, 24
      %v798 = vpop.permute.xlu0 %797
      %799 = vrot.lane.b32.xlu0 %v409, 24
      %v800 = vpop.permute.xlu0 %799
      %801 = vrot.lane.b32.xlu0 %v411, 24
      %v802 = vpop.permute.xlu0 %801
      %803 = vrot.lane.b32.xlu0 %v412, 24
      %v804 = vpop.permute.xlu0 %803
      %805 = vrot.lane.b32.xlu0 %v414, 24
      %v806 = vpop.permute.xlu0 %805
      %807 = vrot.lane.b32.xlu0 %v415, 24
      %v808 = vpop.permute.xlu0 %807
      %809 = vrot.lane.b32.xlu0 %v417, 24
      %v810 = vpop.permute.xlu0 %809
      %811 = vrot.lane.b32.xlu0 %v418, 24
      %v812 = vpop.permute.xlu0 %811
      %v830 = vrot.slane %v417, 1
      %v831 = vrot.slane %v418, 1
      %v832 = vsel %vm444, %v830, %v831
      %v833 = vrot.slane %v419, 1
      %v834 = vsel %vm444, %v831, %v833
      %835 = vrot.lane.b32.xlu0 %v457, 28
      %v836 = vpop.permute.xlu0 %835
      %837 = vrot.lane.b32.xlu0 %v459, 28
      %v838 = vpop.permute.xlu0 %837
      %839 = vrot.lane.b32.xlu0 %v462, 28
      %v840 = vpop.permute.xlu0 %839
      %841 = vrot.lane.b32.xlu0 %v464, 28
      %v842 = vpop.permute.xlu0 %841
      %843 = vrot.lane.b32.xlu0 %v467, 28
      %v844 = vpop.permute.xlu0 %843
      %845 = vrot.lane.b32.xlu0 %v469, 28
      %v846 = vpop.permute.xlu0 %845
      %847 = vrot.lane.b32.xlu0 %v472, 28
      %v848 = vpop.permute.xlu0 %847
      %849 = vrot.lane.b32.xlu0 %v474, 28
      %v850 = vpop.permute.xlu0 %849
      %851 = vrot.lane.b32.xlu0 %v477, 28
      %v852 = vpop.permute.xlu0 %851
      %853 = vrot.lane.b32.xlu0 %v479, 28
      %v854 = vpop.permute.xlu0 %853
      %855 = vrot.lane.b32.xlu0 %v482, 28
      %v856 = vpop.permute.xlu0 %855
      %857 = vrot.lane.b32.xlu0 %v484, 28
      %v858 = vpop.permute.xlu0 %857
      %859 = vrot.lane.b32.xlu0 %v675, 28
      %v860 = vpop.permute.xlu0 %859
      %861 = vrot.lane.b32.xlu0 %v677, 28
      %v862 = vpop.permute.xlu0 %861
      %863 = vrot.lane.b32.xlu0 %v832, 28
      %v864 = vpop.permute.xlu0 %863
      %865 = vrot.lane.b32.xlu0 %v834, 28
      %v866 = vpop.permute.xlu0 %865
      %v883 = vrot.slane %v417, 2
      %v884 = vrot.slane %v418, 2
      %v885 = vsel %vm533, %v883, %v884
      %v886 = vrot.slane %v419, 2
      %v887 = vsel %vm533, %v884, %v886
      %888 = vrot.lane.b32.xlu0 %v546, 32
      %v889 = vpop.permute.xlu0 %888
      %890 = vrot.lane.b32.xlu0 %v548, 32
      %v891 = vpop.permute.xlu0 %890
      %892 = vrot.lane.b32.xlu0 %v551, 32
      %v893 = vpop.permute.xlu0 %892
      %894 = vrot.lane.b32.xlu0 %v553, 32
      %v895 = vpop.permute.xlu0 %894
      %896 = vrot.lane.b32.xlu0 %v556, 32
      %v897 = vpop.permute.xlu0 %896
      %898 = vrot.lane.b32.xlu0 %v558, 32
      %v899 = vpop.permute.xlu0 %898
      %900 = vrot.lane.b32.xlu0 %v561, 32
      %v901 = vpop.permute.xlu0 %900
      %902 = vrot.lane.b32.xlu0 %v563, 32
      %v903 = vpop.permute.xlu0 %902
      %904 = vrot.lane.b32.xlu0 %v566, 32
      %v905 = vpop.permute.xlu0 %904
      %906 = vrot.lane.b32.xlu0 %v568, 32
      %v907 = vpop.permute.xlu0 %906
      %908 = vrot.lane.b32.xlu0 %v571, 32
      %v909 = vpop.permute.xlu0 %908
      %910 = vrot.lane.b32.xlu0 %v573, 32
      %v911 = vpop.permute.xlu0 %910
      %912 = vrot.lane.b32.xlu0 %v728, 32
      %v913 = vpop.permute.xlu0 %912
      %914 = vrot.lane.b32.xlu0 %v730, 32
      %v915 = vpop.permute.xlu0 %914
      %916 = vrot.lane.b32.xlu0 %v885, 32
      %v917 = vpop.permute.xlu0 %916
      %918 = vrot.lane.b32.xlu0 %v887, 32
      %v919 = vpop.permute.xlu0 %918
      %vm936 = vcmask 31744
      %v937 = vsel %vm936, %v390, %v486
      %v938 = vsel %vm936, %v391, %v488
      %v939 = vsel %vm936, %v393, %v490
      %v940 = vsel %vm936, %v394, %v492
      %v941 = vsel %vm936, %v396, %v494
      %v942 = vsel %vm936, %v397, %v496
      %v943 = vsel %vm936, %v399, %v498
      %v944 = vsel %vm936, %v400, %v500
      %v945 = vsel %vm936, %v402, %v502
      %v946 = vsel %vm936, %v403, %v504
      %v947 = vsel %vm936, %v405, %v506
      %v948 = vsel %vm936, %v406, %v508
      %v949 = vsel %vm936, %v408, %v510
      %v950 = vsel %vm936, %v409, %v512
      %v951 = vsel %vm936, %v411, %v514
      %v952 = vsel %vm936, %v412, %v516
      %vm953 = vcmask 64512
      %v954 = vsel %vm953, %v937, %v575
      %v955 = vsel %vm953, %v938, %v577
      %v956 = vsel %vm953, %v939, %v579
      %v957 = vsel %vm953, %v940, %v581
      %v958 = vsel %vm953, %v941, %v583
      %v959 = vsel %vm953, %v942, %v585
      %v960 = vsel %vm953, %v943, %v587
      %v961 = vsel %vm953, %v944, %v589
      %v962 = vsel %vm953, %v945, %v591
      %v963 = vsel %vm953, %v946, %v593
      %v964 = vsel %vm953, %v947, %v595
      %v965 = vsel %vm953, %v948, %v597
      %v966 = vsel %vm953, %v949, %v599
      %v967 = vsel %vm953, %v950, %v601
      %v968 = vsel %vm953, %v951, %v603
      %v969 = vsel %vm953, %v952, %v605
      %vm970 = vcmask 97280
      %v971 = vsel %vm970, %v954, %v625
      %v972 = vsel %vm970, %v955, %v627
      %v973 = vsel %vm970, %v956, %v629
      %v974 = vsel %vm970, %v957, %v631
      %v975 = vsel %vm970, %v958, %v633
      %v976 = vsel %vm970, %v959, %v635
      %v977 = vsel %vm970, %v960, %v637
      %v978 = vsel %vm970, %v961, %v639
      %v979 = vsel %vm970, %v962, %v641
      %v980 = vsel %vm970, %v963, %v643
      %v981 = vsel %vm970, %v964, %v645
      %v982 = vsel %vm970, %v965, %v647
      %v983 = vsel %vm970, %v966, %v649
      %v984 = vsel %vm970, %v967, %v651
      %v985 = vsel %vm970, %v968, %v653
      %v986 = vsel %vm970, %v969, %v655
      %vm987 = vcmask 130048
      %v988 = vsel %vm987, %v971, %v679
      %v989 = vsel %vm987, %v972, %v681
      %v990 = vsel %vm987, %v973, %v683
      %v991 = vsel %vm987, %v974, %v685
      %v992 = vsel %vm987, %v975, %v687
      %v993 = vsel %vm987, %v976, %v689
      %v994 = vsel %vm987, %v977, %v691
      %v995 = vsel %vm987, %v978, %v693
      %v996 = vsel %vm987, %v979, %v695
      %v997 = vsel %vm987, %v980, %v697
      %v998 = vsel %vm987, %v981, %v699
      %v999 = vsel %vm987, %v982, %v701
      %v1000 = vsel %vm987, %v983, %v703
      %v1001 = vsel %vm987, %v984, %v705
      %v1002 = vsel %vm987, %v985, %v707
      %v1003 = vsel %vm987, %v986, %v709
      %vm1004 = vcmask 162816
      %v1005 = vsel %vm1004, %v988, %v732
      %v1006 = vsel %vm1004, %v989, %v734
      %v1007 = vsel %vm1004, %v990, %v736
      %v1008 = vsel %vm1004, %v991, %v738
      %v1009 = vsel %vm1004, %v992, %v740
      %v1010 = vsel %vm1004, %v993, %v742
      %v1011 = vsel %vm1004, %v994, %v744
      %v1012 = vsel %vm1004, %v995, %v746
      %v1013 = vsel %vm1004, %v996, %v748
      %v1014 = vsel %vm1004, %v997, %v750
      %v1015 = vsel %vm1004, %v998, %v752
      %v1016 = vsel %vm1004, %v999, %v754
      %v1017 = vsel %vm1004, %v1000, %v756
      %v1018 = vsel %vm1004, %v1001, %v758
      %v1019 = vsel %vm1004, %v1002, %v760
      %v1020 = vsel %vm1004, %v1003, %v762
      %vm1021 = vcmask 195584
      %v1022 = vsel %vm1021, %v1005, %v782
      %v1023 = vsel %vm1021, %v1006, %v784
      %v1024 = vsel %vm1021, %v1007, %v786
      %v1025 = vsel %vm1021, %v1008, %v788
      %v1026 = vsel %vm1021, %v1009, %v790
      %v1027 = vsel %vm1021, %v1010, %v792
      %v1028 = vsel %vm1021, %v1011, %v794
      %v1029 = vsel %vm1021, %v1012, %v796
      %v1030 = vsel %vm1021, %v1013, %v798
      %v1031 = vsel %vm1021, %v1014, %v800
      %v1032 = vsel %vm1021, %v1015, %v802
      %v1033 = vsel %vm1021, %v1016, %v804
      %v1034 = vsel %vm1021, %v1017, %v806
      %v1035 = vsel %vm1021, %v1018, %v808
      %v1036 = vsel %vm1021, %v1019, %v810
      %v1037 = vsel %vm1021, %v1020, %v812
      %vm1038 = vcmask 228352
      %v1039 = vsel %vm1038, %v1022, %v836
      %v1040 = vsel %vm1038, %v1023, %v838
      %v1041 = vsel %vm1038, %v1024, %v840
      %v1042 = vsel %vm1038, %v1025, %v842
      %v1043 = vsel %vm1038, %v1026, %v844
      %v1044 = vsel %vm1038, %v1027, %v846
      %v1045 = vsel %vm1038, %v1028, %v848
      %v1046 = vsel %vm1038, %v1029, %v850
      %v1047 = vsel %vm1038, %v1030, %v852
      %v1048 = vsel %vm1038, %v1031, %v854
      %v1049 = vsel %vm1038, %v1032, %v856
      %v1050 = vsel %vm1038, %v1033, %v858
      %v1051 = vsel %vm1038, %v1034, %v860
      %v1052 = vsel %vm1038, %v1035, %v862
      %v1053 = vsel %vm1038, %v1036, %v864
      %v1054 = vsel %vm1038, %v1037, %v866
      %vm1055 = vcmask 261120
      %v1056 = vsel %vm1055, %v1039, %v889
      %v1057 = vsel %vm1055, %v1040, %v891
      %v1058 = vsel %vm1055, %v1041, %v893
      %v1059 = vsel %vm1055, %v1042, %v895
      %v1060 = vsel %vm1055, %v1043, %v897
      %v1061 = vsel %vm1055, %v1044, %v899
      %v1062 = vsel %vm1055, %v1045, %v901
      %v1063 = vsel %vm1055, %v1046, %v903
      %v1064 = vsel %vm1055, %v1047, %v905
      %v1065 = vsel %vm1055, %v1048, %v907
      %v1066 = vsel %vm1055, %v1049, %v909
      %v1067 = vsel %vm1055, %v1050, %v911
      %v1068 = vsel %vm1055, %v1051, %v913
      %v1069 = vsel %vm1055, %v1052, %v915
      %v1070 = vsel %vm1055, %v1053, %v917
      %v1071 = vsel %vm1055, %v1054, %v919
      %v1072 = vld [vmem:[%s3] sm:$0xff]
      %v1073 = vld [vmem:[%s3 + $0x8] sm:$0xff]
      %v1074 = vld [vmem:[%s3 + $0x10] sm:$0xff]
      %v1075 = vld [vmem:[%s3 + $0x18] sm:$0xff]
      %v1076 = vld [vmem:[%s3 + $0x20] sm:$0xf]
      %v1077 = vld [vmem:[%s4] sm:$0x1]
      %v1079 = vperm.slane %v1077, 0
      %vm1081 = vcmask 293888
      %v1083 = vsel %vm1081, %v1056, 0
      %v1086 = vsel %vm1081, %v1057, 0
      %v1089 = vsel %vm1081, %v1058, 0
      %v1092 = vsel %vm1081, %v1059, 0
      %v1095 = vsel %vm1081, %v1060, 0
      %v1098 = vsel %vm1081, %v1061, 0
      %v1101 = vsel %vm1081, %v1062, 0
      %v1104 = vsel %vm1081, %v1063, 0
      %v1107 = vsel %vm1081, %v1064, 0
      %v1110 = vsel %vm1081, %v1065, 0
      %v1113 = vsel %vm1081, %v1066, 0
      %v1116 = vsel %vm1081, %v1067, 0
      %v1119 = vsel %vm1081, %v1068, 0
      %v1122 = vsel %vm1081, %v1069, 0
      %v1125 = vsel %vm1081, %v1070, 0
      %v1128 = vsel %vm1081, %v1071, 0
      %vm1130 = vcmask 1043456
      %v1132 = vsel %vm1130, %v1076, 0
      %1134 = vmatpush.msra.mxu0 0.0
      %1135 = vmatpush.msra.mxu0 0.0
      %1136 = vmatpush.msra.mxu0 0.0
      %1137 = vmatpush.msra.mxu0 0.0
      %1138 = vmatpush.msra.mxu0 0.0
      %1139 = vmatpush.msra.mxu0 0.0
      %1140 = vmatpush.msra.mxu0 0.0
      %1141 = vmatpush.msra.mxu0 0.0
      %1142 = vmatpush.msra.mxu0 0.0
      %1143 = vmatpush.msra.mxu0 0.0
      %1144 = vmatpush.msra.mxu0 0.0
      %1145 = vmatpush.msra.mxu0 %v1132
      %1146 = vmatpush.msra.mxu0 %v1075
      %1147 = vmatpush.msra.mxu0 %v1074
      %1148 = vmatpush.msra.mxu0 %v1073
      %1149 = vmatpush.msra.mxu0 %v1072
      %1150 = vmatmul.f32.gmra.mxu0 %v1083
      %v1151 = vpop.f32.mrf.mxu0
      %v1152 = vadd.f32 %v1079, %v1151
      %1153 = vmatmul.f32.gmra.mxu0 %v1086
      %v1154 = vpop.f32.mrf.mxu0
      %v1155 = vadd.f32 %v1079, %v1154
      %1156 = vmatmul.f32.gmra.mxu0 %v1089
      %v1157 = vpop.f32.mrf.mxu0
      %v1158 = vadd.f32 %v1079, %v1157
      %1159 = vmatmul.f32.gmra.mxu0 %v1092
      %v1160 = vpop.f32.mrf.mxu0
      %v1161 = vadd.f32 %v1079, %v1160
      %1162 = vmatmul.f32.gmra.mxu0 %v1095
      %v1163 = vpop.f32.mrf.mxu0
      %v1164 = vadd.f32 %v1079, %v1163
      %1165 = vmatmul.f32.gmra.mxu0 %v1098
      %v1166 = vpop.f32.mrf.mxu0
      %v1167 = vadd.f32 %v1079, %v1166
      %1168 = vmatmul.f32.gmra.mxu0 %v1101
      %v1169 = vpop.f32.mrf.mxu0
      %v1170 = vadd.f32 %v1079, %v1169
      %1171 = vmatmul.f32.gmra.mxu0 %v1104
      %v1172 = vpop.f32.mrf.mxu0
      %v1173 = vadd.f32 %v1079, %v1172
      %1174 = vmatmul.f32.gmra.mxu0 %v1107
      %v1175 = vpop.f32.mrf.mxu0
      %v1176 = vadd.f32 %v1079, %v1175
      %1177 = vmatmul.f32.gmra.mxu0 %v1110
      %v1178 = vpop.f32.mrf.mxu0
      %v1179 = vadd.f32 %v1079, %v1178
      %1180 = vmatmul.f32.gmra.mxu0 %v1113
      %v1181 = vpop.f32.mrf.mxu0
      %v1182 = vadd.f32 %v1079, %v1181
      %1183 = vmatmul.f32.gmra.mxu0 %v1116
      %v1184 = vpop.f32.mrf.mxu0
      %v1185 = vadd.f32 %v1079, %v1184
      %1186 = vmatmul.f32.gmra.mxu0 %v1119
      %v1187 = vpop.f32.mrf.mxu0
      %v1188 = vadd.f32 %v1079, %v1187
      %1189 = vmatmul.f32.gmra.mxu0 %v1122
      %v1190 = vpop.f32.mrf.mxu0
      %v1191 = vadd.f32 %v1079, %v1190
      %1192 = vmatmul.f32.gmra.mxu0 %v1125
      %v1193 = vpop.f32.mrf.mxu0
      %v1194 = vadd.f32 %v1079, %v1193
      %1195 = vmatmul.f32.gmra.mxu0 %v1128
      %v1196 = vpop.f32.mrf.mxu0
      %v1197 = vadd.f32 %v1079, %v1196
      %1198 = vdwg.mxu0
      %v1199 = vmax.f32 %v1152, 0.0
      %v1200 = vmax.f32 %v1155, 0.0
      %v1201 = vmax.f32 %v1158, 0.0
      %v1202 = vmax.f32 %v1161, 0.0
      %v1203 = vmax.f32 %v1164, 0.0
      %v1204 = vmax.f32 %v1167, 0.0
      %v1205 = vmax.f32 %v1170, 0.0
      %v1206 = vmax.f32 %v1173, 0.0
      %v1207 = vmax.f32 %v1176, 0.0
      %v1208 = vmax.f32 %v1179, 0.0
      %v1209 = vmax.f32 %v1182, 0.0
      %v1210 = vmax.f32 %v1185, 0.0
      %v1211 = vmax.f32 %v1188, 0.0
      %v1212 = vmax.f32 %v1191, 0.0
      %v1213 = vmax.f32 %v1194, 0.0
      %v1214 = vmax.f32 %v1197, 0.0
      %1215 = vst.msk [vmem:[%s388] sm:$0xff] %vm953, %v1199
      %1216 = vst.msk [vmem:[%s388 + $0x8] sm:$0xff] %vm953, %v1200
      %1217 = vst.msk [vmem:[%s388 + $0x10] sm:$0xff] %vm953, %v1201
      %1218 = vst.msk [vmem:[%s388 + $0x18] sm:$0xff] %vm953, %v1202
      %1219 = vst.msk [vmem:[%s388 + $0x20] sm:$0xff] %vm953, %v1203
      %1220 = vst.msk [vmem:[%s388 + $0x28] sm:$0xff] %vm953, %v1204
      %1221 = vst.msk [vmem:[%s388 + $0x30] sm:$0xff] %vm953, %v1205
      %1222 = vst.msk [vmem:[%s388 + $0x38] sm:$0xff] %vm953, %v1206
      %1223 = vst.msk [vmem:[%s388 + $0x40] sm:$0xff] %vm953, %v1207
      %1224 = vst.msk [vmem:[%s388 + $0x48] sm:$0xff] %vm953, %v1208
      %1225 = vst.msk [vmem:[%s388 + $0x50] sm:$0xff] %vm953, %v1209
      %1226 = vst.msk [vmem:[%s388 + $0x58] sm:$0xff] %vm953, %v1210
      %1227 = vst.msk [vmem:[%s388 + $0x60] sm:$0xff] %vm953, %v1211
      %1228 = vst.msk [vmem:[%s388 + $0x68] sm:$0xff] %vm953, %v1212
      %1229 = vst.msk [vmem:[%s388 + $0x70] sm:$0xff] %vm953, %v1213
      %1230 = vst.msk [vmem:[%s388 + $0x78] sm:$0xff] %vm953, %v1214
      %s1231 = smul.u32 8, %s21
      %p1232 = scmp.lt.s32.totalorder %s20, 1
      %s1233 = scalar_select %p1232, %s20, 1
      %p1234 = scmp.lt.s32.totalorder %s1231, 15
      %s1235 = scalar_select %p1234, %s1231, 15
      %s1236 = smul.addr %s1235, 2
      %s1237 = smul.addr %s1233, 32
      %s1238 = sadd.s32 %s1236, %s1237
      %s1239 = smul.addr %s1238, 8
      %s1240 = scalar_lea.vmem %s5, %s1239
      // Predicated region
      $region41: #{tpu_custom_call.1} parent=39 // pred_check
        %p1241 = pneg %p182
      $region42: #{tpu_custom_call.1} parent=39 // pred_check_branch
        %1243 = sbr.rel (%p1241) target = $region44
      $region43: #{tpu_custom_call.1} parent=39 // pred_region
        %s1244 = smul.u32 8, %s21
      $region44: #{tpu_custom_call.1} parent=39 // pred_fallthru
        _
    $region40: #{tpu_custom_call.1} parent=5 // pred_fallthru
      _
    %p1245 = scmp.le.s32.totalorder 2, %s11
    // Predicated region
    $region45: #{tpu_custom_call.1} parent=5 // pred_check
      %p1246 = pneg %p1245
    $region46: #{tpu_custom_call.1} parent=5 // pred_check_branch
      %1248 = sbr.rel (%p1246) target = $region48
    $region47: #{tpu_custom_call.1} parent=5 // pred_region
      %s1249 = ssub.s32 %s11, 2
      // Predicated region
      $region49: #{tpu_custom_call.1} parent=47 // pred_check
        %p1250 = pneg %p188
      $region50: #{tpu_custom_call.1} parent=47 // pred_check_branch
        %1252 = sbr.rel (%p1250) target = $region52
      $region51: #{tpu_custom_call.1} parent=47 // pred_region
        %s1253 = smul.u32 8, %s23
        %p1254 = scmp.lt.s32.totalorder %s22, 1
        %s1255 = scalar_select %p1254, %s22, 1
        %p1256 = scmp.lt.s32.totalorder %s1253, 15
        %s1257 = scalar_select %p1256, %s1253, 15
        %s1258 = smul.addr %s1257, 2
        %s1259 = smul.addr %s1255, 32
        %s1260 = sadd.s32 %s1258, %s1259
        %s1261 = smul.addr %s1260, 8
        %s1262 = scalar_lea.vmem %s5, %s1261
      $region52: #{tpu_custom_call.1} parent=47 // pred_fallthru
        _
    $region48: #{tpu_custom_call.1} parent=5 // pred_fallthru
      _
  $region6: #{tpu_custom_call.1} parent=0 // loop_footer
    %s15 = sadd.s32 1, %s11
  $region7: #{tpu_custom_call.1} parent=0 // loop_footer_branch
    %10 = sbr.rel target = $region3
  $region8: #{tpu_custom_call.1} parent=0 // loop_exit
    _

</llo_original>
